<compile_context>
chip_gen: v7x
topology: tpu7x:2x2x1
jax: 0.10.0
libtpu: 0.0.40
codegen_flags: <defaults>
</compile_context>

<pallas_src>
import functools

import jax
import jax.numpy as jnp
from jax.experimental import pallas as pl
from jax.experimental.pallas import tpu as pltpu


# ----------------------------------------------------------------------------
# small helpers
# ----------------------------------------------------------------------------
def _round_up(x, m):
    return (x + m - 1) // m * m


def _pad2(x, rows, cols):
    r, c = x.shape
    if r == rows and c == cols:
        return x
    return jnp.pad(x, ((0, rows - r), (0, cols - c)))


def _sigmoid(x):
    return 1.0 / (1.0 + jnp.exp(-x))


def _log_softmax_rows(x):
    m = jnp.max(x, axis=-1, keepdims=True)
    z = x - m
    return z - jnp.log(jnp.sum(jnp.exp(z), axis=-1, keepdims=True))


def _itemsize(dtype):
    return jnp.zeros((), dtype).dtype.itemsize


@functools.lru_cache(maxsize=None)
def _vmem_capacity_bytes():
    """Physical VMEM of the attached chip (fallback: v7x's 64 MiB, the smallest)."""
    try:
        info = pltpu.get_tpu_info()
        cap = int(getattr(info, "vmem_capacity_bytes", 0))
        if cap > 0:
            return cap
    except Exception:
        pass
    return 64 << 20


def _vmem_limit_bytes(*byte_counts):
    """Generation-aware scoped-VMEM request; leave ~12 MiB for Mosaic scratch."""
    need = int(sum(byte_counts)) + (4 << 20)
    if need <= (16 << 20):                      # fits the most conservative default
        return None
    cap = max(24 << 20, _vmem_capacity_bytes() - (12 << 20))
    return min(need, cap)


def _choose_row_tile(num_nodes):
    """512 on 128-MiB-VMEM chips (v5e/v6e), 256 on v7x; keep >= 2 row steps so the
    "parallel" row axis can actually feed both v7x TensorCores."""
    target = 512 if _vmem_capacity_bytes() >= (100 << 20) else 256
    for rt in (512, 256, 128):
        if rt <= target and pl.cdiv(num_nodes, rt) >= 2:
            return rt
    return 128


def _choose_k_tile(k):
    for tk in (512, 256, 128):
        if k % tk == 0:
            return tk
    raise ValueError("reduction dim must be a multiple of 128")


@functools.lru_cache(maxsize=None)
def _single_buffer_mode():
    """pl.Buffered(1) if this JAX/Mosaic supports single-buffering constant-index
    blocks (halves their VMEM footprint), else None (plain double-buffering)."""
    try:
        try:
            mode = pl.Buffered(buffer_count=1)
        except TypeError:
            mode = pl.Buffered(1)

        def _probe(x_ref, o_ref):
            o_ref[...] = x_ref[...] + 1.0

        out = pl.pallas_call(
            _probe,
            out_shape=jax.ShapeDtypeStruct((16, 128), jnp.float32),
            grid=(2,),
            in_specs=[pl.BlockSpec((8, 128), lambda i: (0, 0),
                                   pipeline_mode=mode)],
            out_specs=pl.BlockSpec((8, 128), lambda i: (i, 0)),
        )(jnp.zeros((8, 128), jnp.float32))
        jax.block_until_ready(out)
        return mode
    except Exception:
        return None


# ----------------------------------------------------------------------------
# kernel 1:  out = epilogue(A @ B) with a K-reduction grid axis
#   epilogue = (*scale + shift) [, relu] [, -inf pad mask + log_softmax]
#   - bf16 MXU operands, f32 VMEM accumulator, lane-dense output stores.
#   - optional adjacency sparsity: scalar-prefetched (row, K)-block occupancy
#     gates the MXU accumulate (empty blocks contribute exactly zero).
# ----------------------------------------------------------------------------
def _matmul_epilogue_kernel(*refs, relu, log_softmax, n_valid, block_skip):
    if block_skip:
        occ_ref, a_ref, b_ref, scale_ref, shift_ref, o_ref, acc_ref = refs
    else:
        a_ref, b_ref, scale_ref, shift_ref, o_ref, acc_ref = refs

    kk = pl.program_id(1)

    @pl.when(kk == 0)
    def _init():
        acc_ref[...] = jnp.zeros_like(acc_ref)

    def _accumulate():
        acc_ref[...] += jnp.dot(a_ref[...].astype(jnp.bfloat16),
                                b_ref[...].astype(jnp.bfloat16),
                                preferred_element_type=jnp.float32)

    if block_skip:
        pl.when(occ_ref[pl.program_id(0), kk] != 0)(_accumulate)
    else:
        _accumulate()

    @pl.when(kk == pl.num_programs(1) - 1)
    def _finalize():
        out = acc_ref[...] * scale_ref[...] + shift_ref[...]
        if relu:
            out = jnp.maximum(out, 0.0)
        if log_softmax:
            if n_valid is not None:       # mask padded class lanes before row reduce
                lane = jax.lax.broadcasted_iota(jnp.int32, out.shape, 1)
                out = jnp.where(lane < n_valid, out, -jnp.inf)
            out = _log_softmax_rows(out)
        o_ref[...] = out.astype(o_ref.dtype)


def fused_matmul(a, b, scale, shift, *, relu=False, log_softmax=False,
                 row_tile=128, out_dtype=jnp.bfloat16, k_tile=None,
                 block_mask=None):
    m, k = a.shape
    kb, n0 = b.shape
    assert kb == k and row_tile % 8 == 0 and m % row_tile == 0

    kp = _round_up(max(k, 128), 128)       # zero K padding contributes nothing
    n = _round_up(max(n0, 128), 128)       # lane-dense output store (unmasked vst)
    if kp != k:
        a = _pad2(a, m, kp)
        b = _pad2(b, kp, n0)
    if n != n0:
        b = _pad2(b, kp, n)
        scale = _pad2(scale, 1, n)
        shift = _pad2(shift, 1, n)

    tk = k_tile if k_tile is not None else _choose_k_tile(kp)
    assert kp % tk == 0
    m_tiles, k_tiles = m // row_tile, kp // tk
    block_skip = block_mask is not None
    if block_skip:
        assert block_mask.shape == (m_tiles, k_tiles)
    n_valid = n0 if (log_softmax and n != n0) else None

    mode = _single_buffer_mode()

    def spec(shape, imap, const=False):
        if const and mode is not None:
            return pl.BlockSpec(shape, imap, pipeline_mode=mode)
        return pl.BlockSpec(shape, imap)

    if block_skip:
        a_map = lambda i, kk, occ: (i, kk)
        b_map = lambda i, kk, occ: (kk, 0)
        c_map = lambda i, kk, occ: (0, 0)
        o_map = lambda i, kk, occ: (i, 0)
    else:
        a_map = lambda i, kk: (i, kk)
        b_map = lambda i, kk: (kk, 0)
        c_map = lambda i, kk: (0, 0)
        o_map = lambda i, kk: (i, 0)

    vmem = _vmem_limit_bytes(
        2 * row_tile * tk * a.dtype.itemsize,                  # A tiles (dbl buf)
        2 * tk * n * b.dtype.itemsize,                         # B tiles (dbl buf)
        (1 if mode is not None else 2) * 2 * 8 * n * 4,        # scale + shift
        2 * row_tile * n * _itemsize(out_dtype),               # output tiles
        row_tile * n * 4)                                      # f32 accumulator

    grid_spec = pltpu.PrefetchScalarGridSpec(
        num_scalar_prefetch=1 if block_skip else 0,
        grid=(m_tiles, k_tiles),
        in_specs=[
            spec((row_tile, tk), a_map),
            spec((tk, n), b_map),
            spec((1, n), c_map, const=True),
            spec((1, n), c_map, const=True),
        ],
        out_specs=spec((row_tile, n), o_map),
        scratch_shapes=[pltpu.VMEM((row_tile, n), jnp.float32)])

    kernel = functools.partial(_matmul_epilogue_kernel, relu=relu,
                               log_softmax=log_softmax, n_valid=n_valid,
                               block_skip=block_skip)
    args = (block_mask, a, b, scale, shift) if block_skip else (a, b, scale, shift)
    out = pl.pallas_call(
        kernel,
        out_shape=jax.ShapeDtypeStruct((m, n), out_dtype),
        grid_spec=grid_spec,
        compiler_params=pltpu.CompilerParams(
            dimension_semantics=("parallel", "arbitrary"),
            vmem_limit_bytes=vmem),
    )(*args)
    return out if n == n0 else out[:, :n0]


# ----------------------------------------------------------------------------
# kernel 2: gated residual + feature transform, fused:
#   alpha = sigmoid(inp . wa + x_gate . wb + b)   (gate dots on the MXU;
#                                                  wa|wb = cols 0|1 of (ch,128) wg)
#   out   = (inp + alpha * (x_app - inp)) @ W     (bf16 MXU, f32 accumulate)
# Gate/gating elementwise math stays f32 (v5e has no bf16 VPU path).
# ----------------------------------------------------------------------------
def _gate_matmul_kernel(*refs, has_src):
    if has_src:
        inp_ref, xsrc_ref, xapp_ref, wg_ref, gb_ref, w_ref, o_ref = refs
    else:
        inp_ref, xapp_ref, wg_ref, gb_ref, w_ref, o_ref = refs
        xsrc_ref = xapp_ref

    wg = wg_ref[...].astype(jnp.bfloat16)
    pa = jnp.dot(inp_ref[...].astype(jnp.bfloat16), wg,
                 preferred_element_type=jnp.float32)
    pb = jnp.dot(xsrc_ref[...].astype(jnp.bfloat16), wg,
                 preferred_element_type=jnp.float32)
    alpha = _sigmoid(pa[:, 0:1] + pb[:, 1:2] + gb_ref[0, 0])     # (rows, 1) f32

    inp = inp_ref[...].astype(jnp.float32)
    gated = inp + alpha * (xapp_ref[...].astype(jnp.float32) - inp)
    o_ref[...] = jnp.dot(gated.astype(jnp.bfloat16),
                         w_ref[...].astype(jnp.bfloat16),
                         preferred_element_type=jnp.float32).astype(o_ref.dtype)


def gated_transform(inp, x_src, x_app, wg, gb, w, *, row_tile=128,
                    out_dtype=jnp.bfloat16):
    m, ch = inp.shape
    assert x_app.shape == (m, ch) and ch % 128 == 0 and m % row_tile == 0
    has_src = x_src is not None
    if has_src:
        assert x_src.shape == (m, ch)
    cw, n0 = w.shape
    assert cw == ch
    n = _round_up(max(n0, 128), 128)
    if n != n0:
        w = _pad2(w, ch, n)

    mode = _single_buffer_mode()

    def const_spec(shape):
        if mode is not None:
            return pl.BlockSpec(shape, lambda i: (0, 0), pipeline_mode=mode)
        return pl.BlockSpec(shape, lambda i: (0, 0))

    row_spec = lambda i: (i, 0)
    in_specs = [pl.BlockSpec((row_tile, ch), row_spec)]          # `input`
    args = [inp]
    if has_src:
        in_specs.append(pl.BlockSpec((row_tile, ch), row_spec))  # x feeding alpha
        args.append(x_src)
    in_specs += [
        pl.BlockSpec((row_tile, ch), row_spec),                  # x gated/applied
        const_spec((ch, 128)),                                   # packed gate wts
        pl.BlockSpec(memory_space=pltpu.MemorySpace.SMEM),       # gate bias scalar
        const_spec((ch, n)),                                     # conv weight
    ]
    args += [x_app, wg, gb, w]

    bufc = 1 if mode is not None else 2
    vmem = _vmem_limit_bytes(
        2 * (3 if has_src else 2) * row_tile * ch * inp.dtype.itemsize,
        bufc * ch * 128 * wg.dtype.itemsize,
        bufc * ch * n * w.dtype.itemsize,
        2 * row_tile * n * _itemsize(out_dtype))

    out = pl.pallas_call(
        functools.partial(_gate_matmul_kernel, has_src=has_src),
        out_shape=jax.ShapeDtypeStruct((m, n), out_dtype),
        grid=(m // row_tile,),
        in_specs=in_specs,
        out_specs=pl.BlockSpec((row_tile, n), row_spec),
        compiler_params=pltpu.CompilerParams(
            dimension_semantics=("parallel",),
            vmem_limit_bytes=vmem),
    )(*args)
    return out if n == n0 else out[:, :n0]


# ----------------------------------------------------------------------------
# full LAGCN1 forward (eval mode)
# ----------------------------------------------------------------------------
def lagcn1_forward(x_list, adj, params, *, row_tile=None,
                   skip_empty_adj_blocks=True):
    """Eval-mode LAGCN1.forward.

    x_list : list of (N, in_channels) node-feature matrices (len == concat)
    adj    : (N, N) dense (normalised) adjacency
    """
    # TODO(synk): training-mode F.dropout (torch RNG stream) and batch-statistic
    # BatchNorm are not reproducible here; eval semantics only (dropout=identity,
    # BN = running-stat scale/shift folded into the matmul epilogue).
    f32, bf16 = jnp.float32, jnp.bfloat16
    n = adj.shape[0]
    if row_tile is None:
        row_tile = _choose_row_tile(n)
    n_pad = _round_up(n, row_tile)
    adj_p = _pad2(adj, n_pad, n_pad).astype(bf16)   # bf16 halves dominant HBM stream

    # Adjacency reduction tile + per-block occupancy (computed once, reused every
    # layer); empty (row_tile x adj_tk) blocks skip the MXU accumulate.
    # TODO(synk): compact nonzero block ids per row tile (data-dependent index_map)
    # so empty adjacency blocks also skip their HBM->VMEM DMA, not just the MXU.
    adj_tk = _choose_k_tile(n_pad)
    occ = None
    if skip_empty_adj_blocks:
        mt, kt = n_pad // row_tile, n_pad // adj_tk
        occ = jnp.any((adj_p != 0).reshape(mt, row_tile, kt, adj_tk),
                      axis=(1, 3)).astype(jnp.int32)

    # Initial convs.  cat_i(adj @ S_i) == adj @ cat_i(S_i): supports are
    # concatenated once and the adjacency is read once for all branches; per-branch
    # bias + eval-BN (+relu) stay folded per column block of the epilogue.
    supports, scales, shifts = [], [], []
    for x_i, p in zip(x_list, params["initial"]):
        x_p = _pad2(x_i, n_pad, x_i.shape[1]).astype(bf16)
        h = p["w"].shape[1]
        supports.append(fused_matmul(
            x_p, p["w"], jnp.ones((1, h), f32), jnp.zeros((1, h), f32),
            row_tile=row_tile, out_dtype=bf16))
        scales.append(p["scale"])
        shifts.append(p["shift"])
    support = jnp.concatenate(supports, axis=-1)
    x = fused_matmul(adj_p, support,
                     jnp.concatenate(scales, axis=-1),
                     jnp.concatenate(shifts, axis=-1),
                     relu=True, row_tile=row_tile, out_dtype=bf16,
                     k_tile=adj_tk, block_mask=occ)
    inp = x

    g = params["gate"]
    assert params["mid"], "LAGCN1.forward requires num_layers >= 3"
    x_src = None
    for p in params["mid"]:
        x_src = x                                   # x that defines alpha this layer
        support = gated_transform(inp, None, x, g["wg"], g["b"], p["w"],
                                  row_tile=row_tile, out_dtype=bf16)
        x = fused_matmul(adj_p, support, p["scale"], p["shift"], relu=True,
                         row_tile=row_tile, out_dtype=bf16,
                         k_tile=adj_tk, block_mask=occ)

    # Final layer: PyTorch reuses the *stale* alpha of the last mid layer;
    # recomputing it from the same x_src yields an identical value.
    p = params["last"]
    out_dim = p["w"].shape[1]
    support = gated_transform(inp, x_src, x, g["wg"], g["b"], p["w"],
                              row_tile=row_tile, out_dtype=bf16)
    out = fused_matmul(adj_p, support, jnp.ones((1, out_dim), f32), p["shift"],
                       log_softmax=True, row_tile=row_tile, out_dtype=f32,
                       k_tile=adj_tk, block_mask=occ)
    return out[:n]


# ----------------------------------------------------------------------------
# deterministic parameters + pure-JAX reference (same bf16/f32 numerics)
# ----------------------------------------------------------------------------
def init_lagcn1_params(key, concat, in_channels, hidden_channels, num_layers,
                       eps=1e-5):
    assert num_layers >= 3
    ch = concat * hidden_channels
    keys = iter(jax.random.split(key, 8 * (concat + num_layers) + 16))

    def uniform(shape, fan_in):
        lim = 1.0 / float(fan_in) ** 0.5
        return jax.random.uniform(next(keys), shape, jnp.float32, -lim, lim)

    def normal(shape, scale=0.1):
        return scale * jax.random.normal(next(keys), shape, jnp.float32)

    def conv_bn(in_dim, out_dim):
        w = uniform((in_dim, out_dim), in_dim)
        bias = uniform((out_dim,), in_dim)
        gamma = 1.0 + normal((out_dim,))
        beta = normal((out_dim,))
        mean = normal((out_dim,))
        var = 1.0 + jnp.abs(normal((out_dim,)))
        s = gamma * jax.lax.rsqrt(var + eps)
        return {"w": w.astype(jnp.bfloat16),          # bf16 MXU operand
                "scale": s.reshape(1, out_dim),
                "shift": (beta - mean * s + bias * s).reshape(1, out_dim)}

    params = {
        "initial": [conv_bn(in_channels, hidden_channels) for _ in range(concat)],
        "mid": [conv_bn(ch, ch) for _ in range(num_layers - 2)],
    }
    w_last = uniform((ch, hidden_channels), ch)
    b_last = uniform((hidden_channels,), ch)
    params["last"] = {"w": w_last.astype(jnp.bfloat16),
                      "shift": b_last.reshape(1, hidden_channels)}
    # `linn` gate: wa | wb packed into columns 0 | 1 of a lane-aligned block.
    w_gate = uniform((2 * ch,), 2 * ch)
    b_gate = uniform((), 2 * ch)
    wg = jnp.zeros((ch, 128), jnp.float32)
    wg = wg.at[:, 0].set(w_gate[:ch]).at[:, 1].set(w_gate[ch:])
    params["gate"] = {"wg": wg.astype(jnp.bfloat16), "b": b_gate.reshape(1, 1)}
    return params


def reference_forward(x_list, adj, params):
    """Pure-JAX reference with the same bf16 carry / f32-accumulate numerics."""
    bf16 = jnp.bfloat16

    def mm(a, b):
        return jnp.dot(a.astype(bf16), b.astype(bf16),
                       preferred_element_type=jnp.float32)

    adj_b = adj.astype(bf16)
    supports, scales, shifts = [], [], []
    for x_i, p in zip(x_list, params["initial"]):
        supports.append(mm(x_i, p["w"]).astype(bf16))
        scales.append(p["scale"])
        shifts.append(p["shift"])
    support = jnp.concatenate(supports, axis=-1)
    scale0 = jnp.concatenate(scales, axis=-1)
    shift0 = jnp.concatenate(shifts, axis=-1)
    x = jnp.maximum(mm(adj_b, support) * scale0 + shift0, 0.0).astype(bf16)
    inp = x
    g = params["gate"]

    def alpha_of(x_gate):
        s = mm(inp, g["wg"])[:, 0:1] + mm(x_gate, g["wg"])[:, 1:2] + g["b"][0, 0]
        return _sigmoid(s)

    def gate_apply(alpha, x_app):
        inp_f = inp.astype(jnp.float32)
        return (inp_f + alpha * (x_app.astype(jnp.float32) - inp_f)).astype(bf16)

    x_src = None
    for p in params["mid"]:
        x_src = x
        support = mm(gate_apply(alpha_of(x), x), p["w"]).astype(bf16)
        x = jnp.maximum(mm(adj_b, support) * p["scale"] + p["shift"],
                        0.0).astype(bf16)

    p = params["last"]
    support = mm(gate_apply(alpha_of(x_src), x), p["w"]).astype(bf16)
    out = mm(adj_b, support) + p["shift"]
    return _log_softmax_rows(out)


if __name__ == "__main__":
    # Small, lane-friendly demo shapes; dropout is an eval-mode identity.
    CONCAT, IN_CH, HID, NUM_LAYERS, DROPOUT = 2, 128, 128, 3, 0.5
    N = 256                                                      # graph nodes

    key = jax.random.PRNGKey(0)
    k_adj, k_x, k_p = jax.random.split(key, 3)

    # random symmetric, self-looped, row-normalised adjacency (dense, ~5% sparse)
    a = (jax.random.uniform(k_adj, (N, N)) < 0.05).astype(jnp.float32)
    a = jnp.maximum(a, a.T) + jnp.eye(N, dtype=jnp.float32)
    adj = a / jnp.sum(a, axis=1, keepdims=True)

    x_keys = jax.random.split(k_x, CONCAT)
    x_list = [jax.random.normal(x_keys[i], (N, IN_CH), jnp.float32)
              for i in range(CONCAT)]

    params = init_lagcn1_params(k_p, CONCAT, IN_CH, HID, NUM_LAYERS)

    out = lagcn1_forward(x_list, adj, params)
    out = jax.block_until_ready(out)
    assert out.shape == (N, HID)

    ref = reference_forward(x_list, adj, params)
    err = float(jnp.max(jnp.abs(out - ref)))
    assert jnp.allclose(out, ref, atol=5e-3, rtol=5e-3), f"max |err| = {err}"
    # rows are log-probabilities
    assert jnp.allclose(jnp.sum(jnp.exp(out), axis=-1), 1.0, atol=1e-3)

    print("KERNEL_OK")
</pallas_src>

<mosaic_0001>
module attributes {stable_mosaic.version = 11 : i64} {
  func.func @_probe(%arg0: i32, %arg1: memref<8x128xf32, #tpu.memory_space<vmem>>, %arg2: memref<8x128xf32, #tpu.memory_space<vmem>>) attributes {dimension_semantics = [#tpu.dimension_semantics<arbitrary>], iteration_bounds = array<i64: 2>, scalar_prefetch = 0 : i64, scratch_operands = 0 : i64, tpu.core_type = #tpu.core_type<tc>, window_params = [{pipeline_mode = #tpu.pipeline_mode<synchronous>, transform_indices = @transform_0, window_bounds = array<i64: 8, 128>}, {transform_indices = @transform_1, window_bounds = array<i64: 8, 128>}]} {
    %c0 = arith.constant 0 : index
    %c0_0 = arith.constant 0 : index
    %0 = vector.load %arg1[%c0, %c0_0] : memref<8x128xf32, #tpu.memory_space<vmem>>, vector<8x128xf32>
    %cst = arith.constant 1.000000e+00 : f32
    %1 = vector.broadcast %cst : f32 to vector<8x128xf32>
    %2 = arith.addf %0, %1 : vector<8x128xf32>
    %c0_1 = arith.constant 0 : index
    %c0_2 = arith.constant 0 : index
    %3 = vector.load %arg2[%c0_1, %c0_2] : memref<8x128xf32, #tpu.memory_space<vmem>>, vector<8x128xf32>
    tpu.vector_store %arg2[%c0_1, %c0_2], %2 {strides = array<i32>} : memref<8x128xf32, #tpu.memory_space<vmem>>, vector<8x128xf32>,
    return
  }
  func.func @transform_0(%arg0: i32) -> (i32, i32) {
    %c0_i32 = arith.constant 0 : i32
    %c0_i32_0 = arith.constant 0 : i32
    %c0_i32_1 = arith.constant 0 : i32
    return %c0_i32, %c0_i32_0 : i32, i32
  }
  func.func @transform_1(%arg0: i32) -> (i32, i32) {
    %c0_i32 = arith.constant 0 : i32
    %c0_i32_0 = arith.constant 0 : i32
    return %arg0, %c0_i32 : i32, i32
  }
}

module attributes {stable_mosaic.version = 11 : i64} {
  func.func @_matmul_epilogue_kernel(%arg0: i32, %arg1: i32, %arg2: memref<128x128xbf16, #tpu.memory_space<vmem>>, %arg3: memref<128x128xbf16, #tpu.memory_space<vmem>>, %arg4: memref<1x128xf32, #tpu.memory_space<vmem>>, %arg5: memref<1x128xf32, #tpu.memory_space<vmem>>, %arg6: memref<128x128xbf16, #tpu.memory_space<vmem>>, %arg7: memref<128x128xf32, #tpu.memory_space<vmem>>) attributes {dimension_semantics = [#tpu.dimension_semantics<parallel>, #tpu.dimension_semantics<arbitrary>], iteration_bounds = array<i64: 2, 1>, scalar_prefetch = 0 : i64, scratch_operands = 1 : i64, tpu.core_type = #tpu.core_type<tc>, window_params = [{transform_indices = @transform_0, window_bounds = array<i64: 128, 128>}, {transform_indices = @transform_1, window_bounds = array<i64: 128, 128>}, {pipeline_mode = #tpu.pipeline_mode<synchronous>, transform_indices = @transform_2, window_bounds = array<i64: 1, 128>}, {pipeline_mode = #tpu.pipeline_mode<synchronous>, transform_indices = @transform_3, window_bounds = array<i64: 1, 128>}, {transform_indices = @transform_4, window_bounds = array<i64: 128, 128>}]} {
    %c0_i32 = arith.constant 0 : i32
    %0 = arith.cmpi eq, %arg1, %c0_i32 : i32
    %1 = arith.extui %0 : i1 to i32
    %c0_i32_0 = arith.constant 0 : i32
    %2 = arith.cmpi ne, %1, %c0_i32_0 : i32
    scf.if %2 {
      %cst_10 = arith.constant 0.000000e+00 : f32
      %12 = vector.broadcast %cst_10 : f32 to vector<128x128xf32>
      %c0_11 = arith.constant 0 : index
      %c0_12 = arith.constant 0 : index
      %13 = vector.load %arg7[%c0_11, %c0_12] : memref<128x128xf32, #tpu.memory_space<vmem>>, vector<128x128xf32>
      tpu.vector_store %arg7[%c0_11, %c0_12], %12 {strides = array<i32>} : memref<128x128xf32, #tpu.memory_space<vmem>>, vector<128x128xf32>,
    } else {
    }
    %c0 = arith.constant 0 : index
    %c0_1 = arith.constant 0 : index
    %3 = vector.load %arg7[%c0, %c0_1] : memref<128x128xf32, #tpu.memory_space<vmem>>, vector<128x128xf32>
    %c0_2 = arith.constant 0 : index
    %c0_3 = arith.constant 0 : index
    %4 = vector.load %arg2[%c0_2, %c0_3] : memref<128x128xbf16, #tpu.memory_space<vmem>>, vector<128x128xbf16>
    %c0_4 = arith.constant 0 : index
    %c0_5 = arith.constant 0 : index
    %5 = vector.load %arg3[%c0_4, %c0_5] : memref<128x128xbf16, #tpu.memory_space<vmem>>, vector<128x128xbf16>
    %cst = arith.constant dense<0.000000e+00> : vector<128x128xf32>
    %6 = tpu.matmul %4, %5, %cst {dimension_numbers = #tpu.dot_dimension_numbers<[1], [0], [0], [1], [0, 0, 1, 1], [], []>} : vector<128x128xbf16>, vector<128x128xbf16>, vector<128x128xf32> -> vector<128x128xf32>
    %7 = arith.addf %3, %6 : vector<128x128xf32>
    %c0_6 = arith.constant 0 : index
    %c0_7 = arith.constant 0 : index
    %8 = vector.load %arg7[%c0_6, %c0_7] : memref<128x128xf32, #tpu.memory_space<vmem>>, vector<128x128xf32>
    tpu.vector_store %arg7[%c0_6, %c0_7], %7 {strides = array<i32>} : memref<128x128xf32, #tpu.memory_space<vmem>>, vector<128x128xf32>,
    %c0_i32_8 = arith.constant 0 : i32
    %9 = arith.cmpi eq, %arg1, %c0_i32_8 : i32
    %10 = arith.extui %9 : i1 to i32
    %c0_i32_9 = arith.constant 0 : i32
    %11 = arith.cmpi ne, %10, %c0_i32_9 : i32
    scf.if %11 {
      %c0_10 = arith.constant 0 : index
      %c0_11 = arith.constant 0 : index
      %12 = vector.load %arg7[%c0_10, %c0_11] : memref<128x128xf32, #tpu.memory_space<vmem>>, vector<128x128xf32>
      %c0_12 = arith.constant 0 : index
      %c0_13 = arith.constant 0 : index
      %13 = vector.load %arg4[%c0_12, %c0_13] : memref<1x128xf32, #tpu.memory_space<vmem>>, vector<1x128xf32>
      %14 = vector.broadcast %13 : vector<1x128xf32> to vector<128x128xf32>
      %15 = arith.mulf %12, %14 : vector<128x128xf32>
      %c0_14 = arith.constant 0 : index
      %c0_15 = arith.constant 0 : index
      %16 = vector.load %arg5[%c0_14, %c0_15] : memref<1x128xf32, #tpu.memory_space<vmem>>, vector<1x128xf32>
      %17 = vector.broadcast %16 : vector<1x128xf32> to vector<128x128xf32>
      %18 = arith.addf %15, %17 : vector<128x128xf32>
      %19 = arith.truncf %18 : vector<128x128xf32> to vector<128x128xbf16>
      %c0_16 = arith.constant 0 : index
      %c0_17 = arith.constant 0 : index
      %20 = vector.load %arg6[%c0_16, %c0_17] : memref<128x128xbf16, #tpu.memory_space<vmem>>, vector<128x128xbf16>
      tpu.vector_store %arg6[%c0_16, %c0_17], %19 {strides = array<i32>} : memref<128x128xbf16, #tpu.memory_space<vmem>>, vector<128x128xbf16>,
    } else {
    }
    return
  }
  func.func @transform_0(%arg0: i32, %arg1: i32) -> (i32, i32) {
    %c0_i32 = arith.constant 0 : i32
    return %arg0, %arg1 : i32, i32
  }
  func.func @transform_1(%arg0: i32, %arg1: i32) -> (i32, i32) {
    %c0_i32 = arith.constant 0 : i32
    %c0_i32_0 = arith.constant 0 : i32
    return %arg1, %c0_i32 : i32, i32
  }
  func.func @transform_2(%arg0: i32, %arg1: i32) -> (i32, i32) {
    %c0_i32 = arith.constant 0 : i32
    %c0_i32_0 = arith.constant 0 : i32
    %c0_i32_1 = arith.constant 0 : i32
    return %c0_i32, %c0_i32_0 : i32, i32
  }
  func.func @transform_3(%arg0: i32, %arg1: i32) -> (i32, i32) {
    %c0_i32 = arith.constant 0 : i32
    %c0_i32_0 = arith.constant 0 : i32
    %c0_i32_1 = arith.constant 0 : i32
    return %c0_i32, %c0_i32_0 : i32, i32
  }
  func.func @transform_4(%arg0: i32, %arg1: i32) -> (i32, i32) {
    %c0_i32 = arith.constant 0 : i32
    %c0_i32_0 = arith.constant 0 : i32
    return %arg0, %c0_i32 : i32, i32
  }
}

</mosaic_0001>

<llo_original>
// kernel: tpu_custom_call.1
$region0: #{tpu_custom_call.1}
  #allocation0 [shape = 'u32[]', space=smem, size = 0x4, offset = 0x4, fixed_abs, tag = 'smem constant byte address 0x4 - core index']
  #allocation1 [shape = 'u32[144,128]{1,0:T(1,128)}', space=vmem, size = 0x12000, scoped, tag = 'internal scratch']
  %s0 = inlined_call_operand.hbm [shape: f32[8,128], index: 0, kind: input, shape index: {}]
  %s1 = inlined_call_operand.hbm [shape: f32[16,128], index: 1, kind: output, shape index: {}]
  %s2 = sld [smem:[#allocation0]]
  $region41: #{tpu_custom_call.1} parent=0
    _
  %s4 = ssub.s32 1, %s2
  %s5 = scalar_select 0, %s4, %s2
  $region1: #{tpu_custom_call.1} parent=0
    #allocation2 [shape = 'u8[4096]{0}', space=vmem, size = 0x1000, scoped, tag = 'input window, operand 0, single buffered']
    #allocation3 [shape = 's32[2]{0}', space=sflag, size = 0x8, scoped, tag = 'scoped memory for tpu_custom_call.1']
    #allocation4 [shape = 's32[2]{0}', space=sflag, size = 0x8, scoped, tag = 'scoped memory for tpu_custom_call.1']
    #allocation5 [shape = 'u8[8192]{0}', space=vmem, size = 0x2000, scoped, tag = 'output window, operand 0']
    %6 = vsyncpa [#allocation3], 0
    %7 = vsyncpa [#allocation4], 0
    %s8 = scalar_lea.sflag [#allocation4], 1
    %9 = vsyncpa %s8, 0
    loop: start=0, step=1, limit=4
    $region2: #{tpu_custom_call.1} parent=1 // loop_pre_header
      _
    $region3: #{tpu_custom_call.1} parent=1 // loop_header
      %s11 = sphi 0, %s15
      %p12 = scmp.ge.s32.totalorder %s11, 4
      %s19 = sphi 0, %s19
      %s21 = sphi 0, %s19
      %s22 = sphi 0, %s21
      %s36 = sphi 0, %s22
      %s42 = sphi 0, %s44
      %s45 = sphi 0, %s42
      %s46 = sphi 0, %s45
      %s62 = sphi 0, %s46
    $region4: #{tpu_custom_call.1} parent=1 // loop_header_branch
      %14 = sbr.rel (%p12) target = $region8
    $region5: #{tpu_custom_call.1} parent=1 // loop_body
      %s16 = ssub.s32 %s11, 1
      %s17 = ssub.s32 %s11, 2
      %s18 = sadd.s32 %s11, 1
      %s20 = sadd.s32 %s19, 1
      %p23 = scmp.eq.s32.totalorder %s11, 1
      %p24 = scmp.ne.s32.totalorder %s19, %s21
      %p25 = scmp.eq.s32.totalorder %s11, 0
      %p26 = por %p24, %p25
      %p27 = scmp.ne.s32.totalorder %s19, %s21
      %p28 = scmp.eq.s32.totalorder %s16, 1
      %p29 = por %p27, %p28
      %p30 = scmp.ne.s32.totalorder %s21, %s22
      %p31 = scmp.eq.s32.totalorder %s16, 0
      %p32 = por %p30, %p31
      %p33 = scmp.ne.s32.totalorder %s21, %s22
      %p34 = scmp.eq.s32.totalorder %s17, 1
      %p35 = por %p33, %p34
      %p37 = scmp.ne.s32.totalorder %s22, %s36
      %p38 = scmp.eq.s32.totalorder %s17, 0
      %p39 = por %p37, %p38
      %s40 = ssub.s32 %s11, %s18
      %p41 = scmp.eq.s32.totalorder %s40, 0
      %s43 = sadd.s32 %s42, 1
      %s44 = scalar_select %p41, %s42, %s43
      %p47 = pneg %p41
      %p48 = scmp.eq.s32.totalorder %s11, 1
      %p49 = por %p47, %p48
      %p50 = scmp.ne.s32.totalorder %s42, %s45
      %p51 = scmp.eq.s32.totalorder %s11, 0
      %p52 = por %p50, %p51
      %p53 = scmp.ne.s32.totalorder %s42, %s45
      %p54 = scmp.eq.s32.totalorder %s16, 1
      %p55 = por %p53, %p54
      %p56 = scmp.ne.s32.totalorder %s45, %s46
      %p57 = scmp.eq.s32.totalorder %s16, 0
      %p58 = por %p56, %p57
      %p59 = scmp.ne.s32.totalorder %s45, %s46
      %p60 = scmp.eq.s32.totalorder %s17, 1
      %p61 = por %p59, %p60
      %p63 = scmp.ne.s32.totalorder %s46, %s62
      %p64 = scmp.eq.s32.totalorder %s17, 0
      %p65 = por %p63, %p64
      %p66 = scmp.le.s32.totalorder 1, %s11
      %p67 = scmp.lt.s32.totalorder %s11, 3
      %p68 = pnand %p66, %p67
      %p69 = pneg %p68
      // Predicated region
      $region9: #{tpu_custom_call.1} parent=5 // pred_check
        _
      $region10: #{tpu_custom_call.1} parent=5 // pred_check_branch
        %71 = sbr.rel (%p68) target = $region12
      $region11: #{tpu_custom_call.1} parent=5 // pred_region
        %s72 = ssub.s32 %s11, 1
        // Predicated region
        $region13: #{tpu_custom_call.1} parent=11 // pred_check
          %p73 = pneg %p32
        $region14: #{tpu_custom_call.1} parent=11 // pred_check_branch
          %75 = sbr.rel (%p73) target = $region16
        $region15: #{tpu_custom_call.1} parent=11 // pred_region
          %s77 = ssub.s32 128, 128
          %78 = vsyncadd [#allocation3], %s77
          %s80 = sshll.u32 [#allocation2], 4
          %s81 = int_to_ptr.vmem [resolvable:$true] %s80
          %83 = dma.hbm_to_vmem [thread:$0]  %s0, 128, %s81, [#allocation3]
        $region16: #{tpu_custom_call.1} parent=11 // pred_fallthru
          _
      $region12: #{tpu_custom_call.1} parent=5 // pred_fallthru
        _
      %p84 = scmp.lt.s32.totalorder %s11, 2
      // Predicated region
      $region17: #{tpu_custom_call.1} parent=5 // pred_check
        %p85 = pneg %p84
      $region18: #{tpu_custom_call.1} parent=5 // pred_check_branch
        %87 = sbr.rel (%p85) target = $region20
      $region19: #{tpu_custom_call.1} parent=5 // pred_region
        _
      $region20: #{tpu_custom_call.1} parent=5 // pred_fallthru
        _
      %p88 = scmp.le.s32.totalorder 1, %s11
      %p89 = scmp.lt.s32.totalorder %s11, 3
      %p90 = pnand %p88, %p89
      %p91 = pneg %p90
      // Predicated region
      $region21: #{tpu_custom_call.1} parent=5 // pred_check
        _
      $region22: #{tpu_custom_call.1} parent=5 // pred_check_branch
        %93 = sbr.rel (%p90) target = $region24
      $region23: #{tpu_custom_call.1} parent=5 // pred_region
        %s94 = ssub.s32 %s11, 1
        // Predicated region
        $region25: #{tpu_custom_call.1} parent=23 // pred_check
          %p95 = pneg %p32
        $region26: #{tpu_custom_call.1} parent=23 // pred_check_branch
          %97 = sbr.rel (%p95) target = $region28
        $region27: #{tpu_custom_call.1} parent=23 // pred_region
          %98 = dma.done [#allocation3], 128
        $region28: #{tpu_custom_call.1} parent=23 // pred_fallthru
          _
        %p99 = pneg %p32
        %p100 = pneg %p29
        %p101 = pneg %p58
        %p102 = pneg %p55
        %s103 = sand.u32 %s45, 1
        %s104 = scalar_lea.sflag [#allocation4], %s103
        %s105 = sand.u32 %s45, 1
        %s106 = smul.addr %s105, 8
        %s107 = scalar_lea.vmem [#allocation5], %s106
        %v108 = vld [vmem:[#allocation2] sm:$0xff]
        %v109 = vadd.f32 %v108, 1.0
        %110 = vst [vmem:[%s107] sm:$0xff] %v109
        %s111 = sand.u32 %s45, 1
        %s112 = scalar_lea.sflag [#allocation4], %s111
        %s113 = sand.u32 %s45, 1
        %s114 = smul.addr %s113, 8
        %s115 = scalar_lea.vmem [#allocation5], %s114
        // Predicated region
        $region29: #{tpu_custom_call.1} parent=23 // pred_check
          %p116 = pneg %p55
        $region30: #{tpu_custom_call.1} parent=23 // pred_check_branch
          %118 = sbr.rel (%p116) target = $region32
        $region31: #{tpu_custom_call.1} parent=23 // pred_region
          %s120 = ssub.s32 128, 128
          %121 = vsyncadd %s112, %s120
          %s122 = smul.addr %s16, 128
          %s123 = scalar_lea.hbm %s1, %s122
          %s125 = sshll.u32 %s115, 4
          %s126 = int_to_ptr.vmem [resolvable:$true] %s125
          %128 = dma.vmem_to_hbm [thread:$0]  %s126, 128, %s123, %s112
        $region32: #{tpu_custom_call.1} parent=23 // pred_fallthru
          _
      $region24: #{tpu_custom_call.1} parent=5 // pred_fallthru
        _
      %p129 = scmp.le.s32.totalorder 2, %s11
      // Predicated region
      $region33: #{tpu_custom_call.1} parent=5 // pred_check
        %p130 = pneg %p129
      $region34: #{tpu_custom_call.1} parent=5 // pred_check_branch
        %132 = sbr.rel (%p130) target = $region36
      $region35: #{tpu_custom_call.1} parent=5 // pred_region
        %s133 = ssub.s32 %s11, 2
        // Predicated region
        $region37: #{tpu_custom_call.1} parent=35 // pred_check
          %p134 = pneg %p61
        $region38: #{tpu_custom_call.1} parent=35 // pred_check_branch
          %136 = sbr.rel (%p134) target = $region40
        $region39: #{tpu_custom_call.1} parent=35 // pred_region
          %s137 = sand.u32 %s46, 1
          %s138 = scalar_lea.sflag [#allocation4], %s137
          %s139 = sand.u32 %s46, 1
          %s140 = smul.addr %s139, 8
          %s141 = scalar_lea.vmem [#allocation5], %s140
          %142 = dma.done %s138, 128
        $region40: #{tpu_custom_call.1} parent=35 // pred_fallthru
          _
      $region36: #{tpu_custom_call.1} parent=5 // pred_fallthru
        _
    $region6: #{tpu_custom_call.1} parent=1 // loop_footer
      %s15 = sadd.s32 1, %s11
    $region7: #{tpu_custom_call.1} parent=1 // loop_footer_branch
      %10 = sbr.rel target = $region3
    $region8: #{tpu_custom_call.1} parent=1 // loop_exit
      _
    %143 = vsyncpa [#allocation3], 1
    %s144 = scalar_lea.sflag [#allocation3], 1
    %145 = vsyncpa %s144, 1
    %146 = vsyncpa [#allocation4], 1
    %s147 = scalar_lea.sflag [#allocation4], 1
    %148 = vsyncpa %s147, 1

// kernel: tpu_custom_call.1
$region0: #{tpu_custom_call.1}
  #allocation0 [shape = 'u32[]', space=smem, size = 0x4, offset = 0x4, fixed_abs, tag = 'smem constant byte address 0x4 - core index']
  #allocation1 [shape = 'u32[144,128]{1,0:T(1,128)}', space=vmem, size = 0x12000, scoped, tag = 'internal scratch']
  #allocation2 [shape = 'f32[128,128]{1,0:T(8,128)}', space=vmem, size = 0x10000, scoped, tag = 'scratch operand']
  %s0 = inlined_call_operand.hbm [shape: bf16[256,128], index: 0, kind: input, shape index: {}]
  %s1 = inlined_call_operand.hbm [shape: bf16[128,128], index: 1, kind: input, shape index: {}]
  %s2 = inlined_call_operand.vmem [shape: f32[1,128], index: 2, kind: input, shape index: {}]
  %s3 = inlined_call_operand.vmem [shape: f32[1,128], index: 3, kind: input, shape index: {}]
  %s4 = inlined_call_operand.hbm [shape: bf16[256,128], index: 4, kind: output, shape index: {}]
  %s5 = sld [smem:[#allocation0]]
  $region65: #{tpu_custom_call.1} parent=0
    _
  %s7 = ssub.s32 1, %s5
  %s8 = scalar_select 0, %s7, %s5
  $region1: #{tpu_custom_call.1} parent=0
    #allocation3 [shape = 'u8[65536]{0}', space=vmem, size = 0x10000, scoped, tag = 'input window, operand 0']
    #allocation4 [shape = 's32[2]{0}', space=sflag, size = 0x8, scoped, tag = 'scoped memory for tpu_custom_call.1']
    #allocation5 [shape = 's32[2]{0}', space=sflag, size = 0x8, scoped, tag = 'scoped memory for tpu_custom_call.1']
    #allocation6 [shape = 'u8[32768]{0}', space=vmem, size = 0x8000, scoped, tag = 'input window, operand 1, single buffered']
    #allocation7 [shape = 's32[1]{0}', space=sflag, size = 0x4, scoped, tag = 'scoped memory for tpu_custom_call.1']
    #allocation8 [shape = 'u8[65536]{0}', space=vmem, size = 0x10000, scoped, tag = 'output window, operand 0']
    %9 = vsyncpa [#allocation4], 0
    %s10 = scalar_lea.sflag [#allocation4], 1
    %11 = vsyncpa %s10, 0
    %12 = vsyncpa [#allocation7], 0
    %13 = vsyncpa [#allocation5], 0
    %s14 = scalar_lea.sflag [#allocation5], 1
    %15 = vsyncpa %s14, 0
    loop: start=0, step=1, limit=4
    $region2: #{tpu_custom_call.1} parent=1 // loop_pre_header
      _
    $region3: #{tpu_custom_call.1} parent=1 // loop_header
      %s17 = sphi 0, %s21
      %p18 = scmp.ge.s32.totalorder %s17, 4
      %s24 = sphi 0, %s36
      %s25 = sphi 0, %s32
      %s26 = sphi 0, %s24
      %s27 = sphi 0, %s25
      %s28 = sphi 0, %s26
      %s29 = sphi 0, %s27
      %s41 = sphi 0, %s43
      %s44 = sphi 0, %s41
      %s45 = sphi 0, %s44
      %s61 = sphi 0, %s45
      %s67 = sphi 0, %s69
      %s70 = sphi 0, %s67
      %s71 = sphi 0, %s70
      %s87 = sphi 0, %s71
      %s91 = sphi 0, %s91
      %s93 = sphi 0, %s91
      %s94 = sphi 0, %s93
      %s108 = sphi 0, %s94
      %s112 = sphi 0, %s112
      %s114 = sphi 0, %s112
      %s115 = sphi 0, %s114
      %s129 = sphi 0, %s115
      %s135 = sphi 0, %s137
      %s138 = sphi 0, %s135
      %s139 = sphi 0, %s138
      %s155 = sphi 0, %s139
    $region4: #{tpu_custom_call.1} parent=1 // loop_header_branch
      %20 = sbr.rel (%p18) target = $region8
    $region5: #{tpu_custom_call.1} parent=1 // loop_body
      %s22 = ssub.s32 %s17, 1
      %s23 = ssub.s32 %s17, 2
      %s30 = sadd.s32 1, %s25
      %p31 = scmp.ge.s32.totalorder %s30, 1
      %s32 = scalar_select %p31, 0, %s30
      %s33 = sadd.s32 1, %s24
      %s34 = scalar_select %p31, %s33, %s24
      %p35 = scmp.ge.s32.totalorder %s34, 2
      %s36 = scalar_select %p35, 0, %s34
      %s37 = ssub.s32 %s24, %s36
      %s38 = ssub.s32 %s25, %s32
      %s39 = sor.u32 %s37, %s38
      %p40 = scmp.eq.s32.totalorder %s39, 0
      %s42 = sadd.s32 %s41, 1
      %s43 = scalar_select %p40, %s41, %s42
      %p46 = pneg %p40
      %p47 = scmp.eq.s32.totalorder %s17, 1
      %p48 = por %p46, %p47
      %p49 = scmp.ne.s32.totalorder %s41, %s44
      %p50 = scmp.eq.s32.totalorder %s17, 0
      %p51 = por %p49, %p50
      %p52 = scmp.ne.s32.totalorder %s41, %s44
      %p53 = scmp.eq.s32.totalorder %s22, 1
      %p54 = por %p52, %p53
      %p55 = scmp.ne.s32.totalorder %s44, %s45
      %p56 = scmp.eq.s32.totalorder %s22, 0
      %p57 = por %p55, %p56
      %p58 = scmp.ne.s32.totalorder %s44, %s45
      %p59 = scmp.eq.s32.totalorder %s23, 1
      %p60 = por %p58, %p59
      %p62 = scmp.ne.s32.totalorder %s45, %s61
      %p63 = scmp.eq.s32.totalorder %s23, 0
      %p64 = por %p62, %p63
      %s65 = ssub.s32 %s25, %s32
      %p66 = scmp.eq.s32.totalorder %s65, 0
      %s68 = sadd.s32 %s67, 1
      %s69 = scalar_select %p66, %s67, %s68
      %p72 = pneg %p66
      %p73 = scmp.eq.s32.totalorder %s17, 1
      %p74 = por %p72, %p73
      %p75 = scmp.ne.s32.totalorder %s67, %s70
      %p76 = scmp.eq.s32.totalorder %s17, 0
      %p77 = por %p75, %p76
      %p78 = scmp.ne.s32.totalorder %s67, %s70
      %p79 = scmp.eq.s32.totalorder %s22, 1
      %p80 = por %p78, %p79
      %p81 = scmp.ne.s32.totalorder %s70, %s71
      %p82 = scmp.eq.s32.totalorder %s22, 0
      %p83 = por %p81, %p82
      %p84 = scmp.ne.s32.totalorder %s70, %s71
      %p85 = scmp.eq.s32.totalorder %s23, 1
      %p86 = por %p84, %p85
      %p88 = scmp.ne.s32.totalorder %s71, %s87
      %p89 = scmp.eq.s32.totalorder %s23, 0
      %p90 = por %p88, %p89
      %s92 = sadd.s32 %s91, 1
      %p95 = scmp.eq.s32.totalorder %s17, 1
      %p96 = scmp.ne.s32.totalorder %s91, %s93
      %p97 = scmp.eq.s32.totalorder %s17, 0
      %p98 = por %p96, %p97
      %p99 = scmp.ne.s32.totalorder %s91, %s93
      %p100 = scmp.eq.s32.totalorder %s22, 1
      %p101 = por %p99, %p100
      %p102 = scmp.ne.s32.totalorder %s93, %s94
      %p103 = scmp.eq.s32.totalorder %s22, 0
      %p104 = por %p102, %p103
      %p105 = scmp.ne.s32.totalorder %s93, %s94
      %p106 = scmp.eq.s32.totalorder %s23, 1
      %p107 = por %p105, %p106
      %p109 = scmp.ne.s32.totalorder %s94, %s108
      %p110 = scmp.eq.s32.totalorder %s23, 0
      %p111 = por %p109, %p110
      %s113 = sadd.s32 %s112, 1
      %p116 = scmp.eq.s32.totalorder %s17, 1
      %p117 = scmp.ne.s32.totalorder %s112, %s114
      %p118 = scmp.eq.s32.totalorder %s17, 0
      %p119 = por %p117, %p118
      %p120 = scmp.ne.s32.totalorder %s112, %s114
      %p121 = scmp.eq.s32.totalorder %s22, 1
      %p122 = por %p120, %p121
      %p123 = scmp.ne.s32.totalorder %s114, %s115
      %p124 = scmp.eq.s32.totalorder %s22, 0
      %p125 = por %p123, %p124
      %p126 = scmp.ne.s32.totalorder %s114, %s115
      %p127 = scmp.eq.s32.totalorder %s23, 1
      %p128 = por %p126, %p127
      %p130 = scmp.ne.s32.totalorder %s115, %s129
      %p131 = scmp.eq.s32.totalorder %s23, 0
      %p132 = por %p130, %p131
      %s133 = ssub.s32 %s24, %s36
      %p134 = scmp.eq.s32.totalorder %s133, 0
      %s136 = sadd.s32 %s135, 1
      %s137 = scalar_select %p134, %s135, %s136
      %p140 = pneg %p134
      %p141 = scmp.eq.s32.totalorder %s17, 1
      %p142 = por %p140, %p141
      %p143 = scmp.ne.s32.totalorder %s135, %s138
      %p144 = scmp.eq.s32.totalorder %s17, 0
      %p145 = por %p143, %p144
      %p146 = scmp.ne.s32.totalorder %s135, %s138
      %p147 = scmp.eq.s32.totalorder %s22, 1
      %p148 = por %p146, %p147
      %p149 = scmp.ne.s32.totalorder %s138, %s139
      %p150 = scmp.eq.s32.totalorder %s22, 0
      %p151 = por %p149, %p150
      %p152 = scmp.ne.s32.totalorder %s138, %s139
      %p153 = scmp.eq.s32.totalorder %s23, 1
      %p154 = por %p152, %p153
      %p156 = scmp.ne.s32.totalorder %s139, %s155
      %p157 = scmp.eq.s32.totalorder %s23, 0
      %p158 = por %p156, %p157
      %p159 = scmp.le.s32.totalorder 1, %s17
      %p160 = scmp.lt.s32.totalorder %s17, 3
      %p161 = pnand %p159, %p160
      %p162 = pneg %p161
      // Predicated region
      $region9: #{tpu_custom_call.1} parent=5 // pred_check
        _
      $region10: #{tpu_custom_call.1} parent=5 // pred_check_branch
        %164 = sbr.rel (%p161) target = $region12
      $region11: #{tpu_custom_call.1} parent=5 // pred_region
        %s165 = ssub.s32 %s17, 1
        // Predicated region
        $region13: #{tpu_custom_call.1} parent=11 // pred_check
          %p166 = pneg %p83
        $region14: #{tpu_custom_call.1} parent=11 // pred_check_branch
          %168 = sbr.rel (%p166) target = $region16
        $region15: #{tpu_custom_call.1} parent=11 // pred_region
          %s169 = smul.u32 16, %s27
          %s171 = ssub.s32 1024, 1024
          %172 = vsyncadd [#allocation7], %s171
          %s173 = smul.addr %s169, 64
          %s174 = scalar_lea.hbm %s1, %s173
          %s175 = sshll.u32 [#allocation6], 4
          %s176 = int_to_ptr.vmem [resolvable:$true] %s175
          %181 = dma.hbm_to_vmem [thread:$0]  %s174, 1024, %s176, [#allocation7], 64, 64, 4
        $region16: #{tpu_custom_call.1} parent=11 // pred_fallthru
          _
        // Predicated region
        $region17: #{tpu_custom_call.1} parent=11 // pred_check
          %p182 = pneg %p104
        $region18: #{tpu_custom_call.1} parent=11 // pred_check_branch
          %184 = sbr.rel (%p182) target = $region20
        $region19: #{tpu_custom_call.1} parent=11 // pred_region
          _
        $region20: #{tpu_custom_call.1} parent=11 // pred_fallthru
          _
        // Predicated region
        $region21: #{tpu_custom_call.1} parent=11 // pred_check
          %p185 = pneg %p125
        $region22: #{tpu_custom_call.1} parent=11 // pred_check_branch
          %187 = sbr.rel (%p185) target = $region24
        $region23: #{tpu_custom_call.1} parent=11 // pred_region
          _
        $region24: #{tpu_custom_call.1} parent=11 // pred_fallthru
          _
      $region12: #{tpu_custom_call.1} parent=5 // pred_fallthru
        _
      %p188 = scmp.lt.s32.totalorder %s17, 2
      // Predicated region
      $region25: #{tpu_custom_call.1} parent=5 // pred_check
        %p189 = pneg %p188
      $region26: #{tpu_custom_call.1} parent=5 // pred_check_branch
        %191 = sbr.rel (%p189) target = $region28
      $region27: #{tpu_custom_call.1} parent=5 // pred_region
        // Predicated region
        $region29: #{tpu_custom_call.1} parent=27 // pred_check
          %p192 = pneg %p51
        $region30: #{tpu_custom_call.1} parent=27 // pred_check_branch
          %194 = sbr.rel (%p192) target = $region32
        $region31: #{tpu_custom_call.1} parent=27 // pred_region
          %s195 = sand.u32 %s41, 1
          %s196 = scalar_lea.sflag [#allocation4], %s195
          %s197 = sand.u32 %s41, 1
          %s198 = smul.addr %s197, 64
          %s199 = scalar_lea.vmem [#allocation3], %s198
          %s200 = smul.u32 16, %s24
          %s202 = ssub.s32 1024, 1024
          %203 = vsyncadd %s196, %s202
          %s204 = sadd.s32 %s25, %s200
          %s205 = smul.addr %s204, 64
          %s206 = scalar_lea.hbm %s0, %s205
          %s207 = sshll.u32 %s199, 4
          %s208 = int_to_ptr.vmem [resolvable:$true] %s207
          %213 = dma.hbm_to_vmem [thread:$0]  %s206, 1024, %s208, %s196, 64, 64, 4
        $region32: #{tpu_custom_call.1} parent=27 // pred_fallthru
          _
      $region28: #{tpu_custom_call.1} parent=5 // pred_fallthru
        _
      %p214 = scmp.le.s32.totalorder 1, %s17
      %p215 = scmp.lt.s32.totalorder %s17, 3
      %p216 = pnand %p214, %p215
      %p217 = pneg %p216
      // Predicated region
      $region33: #{tpu_custom_call.1} parent=5 // pred_check
        _
      $region34: #{tpu_custom_call.1} parent=5 // pred_check_branch
        %219 = sbr.rel (%p216) target = $region36
      $region35: #{tpu_custom_call.1} parent=5 // pred_region
        %s220 = ssub.s32 %s17, 1
        %s221 = sand.u32 %s44, 1
        %s222 = scalar_lea.sflag [#allocation4], %s221
        %s223 = sand.u32 %s44, 1
        %s224 = smul.addr %s223, 64
        %s225 = scalar_lea.vmem [#allocation3], %s224
        // Predicated region
        $region37: #{tpu_custom_call.1} parent=35 // pred_check
          %p226 = pneg %p57
        $region38: #{tpu_custom_call.1} parent=35 // pred_check_branch
          %228 = sbr.rel (%p226) target = $region40
        $region39: #{tpu_custom_call.1} parent=35 // pred_region
          %229 = dma.done %s222, 1024
        $region40: #{tpu_custom_call.1} parent=35 // pred_fallthru
          _
        // Predicated region
        $region41: #{tpu_custom_call.1} parent=35 // pred_check
          %p230 = pneg %p83
        $region42: #{tpu_custom_call.1} parent=35 // pred_check_branch
          %232 = sbr.rel (%p230) target = $region44
        $region43: #{tpu_custom_call.1} parent=35 // pred_region
          %233 = dma.done [#allocation7], 1024
        $region44: #{tpu_custom_call.1} parent=35 // pred_fallthru
          _
        %s234 = sand.u32 %s44, 1
        %s235 = scalar_lea.sflag [#allocation4], %s234
        %s236 = sand.u32 %s44, 1
        %s237 = smul.addr %s236, 64
        %s238 = scalar_lea.vmem [#allocation3], %s237
        %p239 = pneg %p57
        %p240 = pneg %p54
        %p241 = pneg %p83
        %p242 = pneg %p80
        %p243 = pneg %p104
        %p244 = pneg %p101
        %p245 = pneg %p125
        %p246 = pneg %p122
        %p247 = pneg %p151
        %p248 = pneg %p148
        %s249 = sand.u32 %s138, 1
        %s250 = scalar_lea.sflag [#allocation5], %s249
        %s251 = sand.u32 %s138, 1
        %s252 = smul.addr %s251, 64
        %s253 = scalar_lea.vmem [#allocation8], %s252
        %s254 = smul.u32 16, %s26
        %s255 = smul.u32 16, %s27
        %s256 = smul.u32 16, %s26
        %p258 = scmp.eq.s32.totalorder %s27, 0
        // Predicated region
        $region45: #{tpu_custom_call.1} parent=35 // pred_check
          %p259 = pneg %p258
        $region46: #{tpu_custom_call.1} parent=35 // pred_check_branch
          %261 = sbr.rel (%p259) target = $region48
        $region47: #{tpu_custom_call.1} parent=35 // pred_region
          %262 = vst [vmem:[#allocation2] sm:$0xff] 0.0
          %263 = vst [vmem:[#allocation2 + $0x8] sm:$0xff] 0.0
          %264 = vst [vmem:[#allocation2 + $0x10] sm:$0xff] 0.0
          %265 = vst [vmem:[#allocation2 + $0x18] sm:$0xff] 0.0
          %266 = vst [vmem:[#allocation2 + $0x20] sm:$0xff] 0.0
          %267 = vst [vmem:[#allocation2 + $0x28] sm:$0xff] 0.0
          %268 = vst [vmem:[#allocation2 + $0x30] sm:$0xff] 0.0
          %269 = vst [vmem:[#allocation2 + $0x38] sm:$0xff] 0.0
          %270 = vst [vmem:[#allocation2 + $0x40] sm:$0xff] 0.0
          %271 = vst [vmem:[#allocation2 + $0x48] sm:$0xff] 0.0
          %272 = vst [vmem:[#allocation2 + $0x50] sm:$0xff] 0.0
          %273 = vst [vmem:[#allocation2 + $0x58] sm:$0xff] 0.0
          %274 = vst [vmem:[#allocation2 + $0x60] sm:$0xff] 0.0
          %275 = vst [vmem:[#allocation2 + $0x68] sm:$0xff] 0.0
          %276 = vst [vmem:[#allocation2 + $0x70] sm:$0xff] 0.0
          %277 = vst [vmem:[#allocation2 + $0x78] sm:$0xff] 0.0
        $region48: #{tpu_custom_call.1} parent=35 // pred_fallthru
          _
        %v278 = vld [vmem:[#allocation2] sm:$0xff]
        %v279 = vld [vmem:[#allocation2 + $0x8] sm:$0xff]
        %v280 = vld [vmem:[#allocation2 + $0x10] sm:$0xff]
        %v281 = vld [vmem:[#allocation2 + $0x18] sm:$0xff]
        %v282 = vld [vmem:[#allocation2 + $0x20] sm:$0xff]
        %v283 = vld [vmem:[#allocation2 + $0x28] sm:$0xff]
        %v284 = vld [vmem:[#allocation2 + $0x30] sm:$0xff]
        %v285 = vld [vmem:[#allocation2 + $0x38] sm:$0xff]
        %v286 = vld [vmem:[#allocation2 + $0x40] sm:$0xff]
        %v287 = vld [vmem:[#allocation2 + $0x48] sm:$0xff]
        %v288 = vld [vmem:[#allocation2 + $0x50] sm:$0xff]
        %v289 = vld [vmem:[#allocation2 + $0x58] sm:$0xff]
        %v290 = vld [vmem:[#allocation2 + $0x60] sm:$0xff]
        %v291 = vld [vmem:[#allocation2 + $0x68] sm:$0xff]
        %v292 = vld [vmem:[#allocation2 + $0x70] sm:$0xff]
        %v293 = vld [vmem:[#allocation2 + $0x78] sm:$0xff]
        %v294 = vld [vmem:[%s225] sm:$0xf]
        %v295 = vld [vmem:[%s225 + $0x4] sm:$0xf]
        %v296 = vld [vmem:[%s225 + $0x8] sm:$0xf]
        %v297 = vld [vmem:[%s225 + $0xc] sm:$0xf]
        %v298 = vld [vmem:[%s225 + $0x10] sm:$0xf]
        %v299 = vld [vmem:[%s225 + $0x14] sm:$0xf]
        %v300 = vld [vmem:[%s225 + $0x18] sm:$0xf]
        %v301 = vld [vmem:[%s225 + $0x1c] sm:$0xf]
        %v302 = vld [vmem:[%s225 + $0x20] sm:$0xf]
        %v303 = vld [vmem:[%s225 + $0x24] sm:$0xf]
        %v304 = vld [vmem:[%s225 + $0x28] sm:$0xf]
        %v305 = vld [vmem:[%s225 + $0x2c] sm:$0xf]
        %v306 = vld [vmem:[%s225 + $0x30] sm:$0xf]
        %v307 = vld [vmem:[%s225 + $0x34] sm:$0xf]
        %v308 = vld [vmem:[%s225 + $0x38] sm:$0xf]
        %v309 = vld [vmem:[%s225 + $0x3c] sm:$0xf]
        %v310 = vld [vmem:[#allocation6] sm:$0xf]
        %v311 = vld [vmem:[#allocation6 + $0x4] sm:$0xf]
        %v312 = vld [vmem:[#allocation6 + $0x8] sm:$0xf]
        %v313 = vld [vmem:[#allocation6 + $0xc] sm:$0xf]
        %v314 = vld [vmem:[#allocation6 + $0x10] sm:$0xf]
        %v315 = vld [vmem:[#allocation6 + $0x14] sm:$0xf]
        %v316 = vld [vmem:[#allocation6 + $0x18] sm:$0xf]
        %v317 = vld [vmem:[#allocation6 + $0x1c] sm:$0xf]
        %v318 = vld [vmem:[#allocation6 + $0x20] sm:$0xf]
        %v319 = vld [vmem:[#allocation6 + $0x24] sm:$0xf]
        %v320 = vld [vmem:[#allocation6 + $0x28] sm:$0xf]
        %v321 = vld [vmem:[#allocation6 + $0x2c] sm:$0xf]
        %v322 = vld [vmem:[#allocation6 + $0x30] sm:$0xf]
        %v323 = vld [vmem:[#allocation6 + $0x34] sm:$0xf]
        %v324 = vld [vmem:[#allocation6 + $0x38] sm:$0xf]
        %v325 = vld [vmem:[#allocation6 + $0x3c] sm:$0xf]
        %v342 = vunpack.c.l.b16 %v294
        %v343 = vunpack.c.l.b16 %v295
        %v344 = vunpack.c.l.b16 %v296
        %v345 = vunpack.c.l.b16 %v297
        %v346 = vunpack.c.l.b16 %v298
        %v347 = vunpack.c.l.b16 %v299
        %v348 = vunpack.c.l.b16 %v300
        %v349 = vunpack.c.l.b16 %v301
        %v350 = vunpack.c.l.b16 %v302
        %v351 = vunpack.c.l.b16 %v303
        %v352 = vunpack.c.l.b16 %v304
        %v353 = vunpack.c.l.b16 %v305
        %v354 = vunpack.c.l.b16 %v306
        %v355 = vunpack.c.l.b16 %v307
        %v356 = vunpack.c.l.b16 %v308
        %v357 = vunpack.c.l.b16 %v309
        %v358 = vpack.c.b16 %v343, %v342
        %v359 = vpack.c.b16 %v345, %v344
        %v360 = vpack.c.b16 %v347, %v346
        %v361 = vpack.c.b16 %v349, %v348
        %v362 = vpack.c.b16 %v351, %v350
        %v363 = vpack.c.b16 %v353, %v352
        %v364 = vpack.c.b16 %v355, %v354
        %v365 = vpack.c.b16 %v357, %v356
        %v390 = vunpack.c.l.b16 %v310
        %v391 = vunpack.c.l.b16 %v311
        %v392 = vunpack.c.l.b16 %v312
        %v393 = vunpack.c.l.b16 %v313
        %v394 = vunpack.c.l.b16 %v314
        %v395 = vunpack.c.l.b16 %v315
        %v396 = vunpack.c.l.b16 %v316
        %v397 = vunpack.c.l.b16 %v317
        %v398 = vunpack.c.l.b16 %v318
        %v399 = vunpack.c.l.b16 %v319
        %v400 = vunpack.c.l.b16 %v320
        %v401 = vunpack.c.l.b16 %v321
        %v402 = vunpack.c.l.b16 %v322
        %v403 = vunpack.c.l.b16 %v323
        %v404 = vunpack.c.l.b16 %v324
        %v405 = vunpack.c.l.b16 %v325
        %v406 = vpack.c.b16 %v391, %v390
        %v407 = vpack.c.b16 %v393, %v392
        %v408 = vpack.c.b16 %v395, %v394
        %v409 = vpack.c.b16 %v397, %v396
        %v410 = vpack.c.b16 %v399, %v398
        %v411 = vpack.c.b16 %v401, %v400
        %v412 = vpack.c.b16 %v403, %v402
        %v413 = vpack.c.b16 %v405, %v404
        %422 = vmatprep.subr.bf16.mxu0 0
        %423 = vmatpush1.bf16.msra.mxu0 %v406
        %424 = vmatprep.subr.bf16.mxu0 0
        %425 = vmatpush1.bf16.msra.mxu0 %v407
        %426 = vmatprep.subr.bf16.mxu0 0
        %427 = vmatpush1.bf16.msra.mxu0 %v408
        %428 = vmatprep.subr.bf16.mxu0 0
        %429 = vmatpush1.bf16.msra.mxu0 %v409
        %430 = vmatprep.subr.bf16.mxu0 0
        %431 = vmatpush1.bf16.msra.mxu0 %v410
        %432 = vmatprep.subr.bf16.mxu0 0
        %433 = vmatpush1.bf16.msra.mxu0 %v411
        %434 = vmatprep.subr.bf16.mxu0 0
        %435 = vmatpush1.bf16.msra.mxu0 %v412
        %436 = vmatprep.subr.bf16.mxu0 0
        %437 = vmatpush1.bf16.msra.mxu0 %v413
        %438 = vmatprep.subr.bf16.mxu0 0
        %439 = vmatpush1.bf16.msra.mxu0 0
        %440 = vmatprep.subr.bf16.mxu0 0
        %441 = vmatpush1.bf16.msra.mxu0 0
        %442 = vmatprep.subr.bf16.mxu0 0
        %443 = vmatpush1.bf16.msra.mxu0 0
        %444 = vmatprep.subr.bf16.mxu0 0
        %445 = vmatpush1.bf16.msra.mxu0 0
        %446 = vmatprep.subr.bf16.mxu0 0
        %447 = vmatpush1.bf16.msra.mxu0 0
        %448 = vmatprep.subr.bf16.mxu0 0
        %449 = vmatpush1.bf16.msra.mxu0 0
        %450 = vmatprep.subr.bf16.mxu0 0
        %451 = vmatpush1.bf16.msra.mxu0 0
        %452 = vmatprep.subr.bf16.mxu0 0
        %453 = vmatpush1.bf16.msra.mxu0 0
        %454 = vmatprep.mubr.bf16.mxu0 0
        %455 = vmatmul.mubr.bf16.gmra.mrb[0].mxu0 %v358
        %v456 = vpop.f32.mrb[0].mxu0
        %v457 = vadd.f32 0.0, %v456
        %v458 = vpop.f32.mrb[0].mxu0
        %v459 = vpop.f32.mrb[0].mxu0
        %v460 = vadd.f32 0.0, %v459
        %v461 = vpop.f32.mrb[0].mxu0
        %462 = vmatprep.mubr.bf16.mxu0 0
        %463 = vmatmul.mubr.bf16.gmra.mrb[0].mxu0 %v359
        %v464 = vpop.f32.mrb[0].mxu0
        %v465 = vadd.f32 0.0, %v464
        %v466 = vpop.f32.mrb[0].mxu0
        %v467 = vpop.f32.mrb[0].mxu0
        %v468 = vadd.f32 0.0, %v467
        %v469 = vpop.f32.mrb[0].mxu0
        %470 = vmatprep.mubr.bf16.mxu0 0
        %471 = vmatmul.mubr.bf16.gmra.mrb[0].mxu0 %v360
        %v472 = vpop.f32.mrb[0].mxu0
        %v473 = vadd.f32 0.0, %v472
        %v474 = vpop.f32.mrb[0].mxu0
        %v475 = vpop.f32.mrb[0].mxu0
        %v476 = vadd.f32 0.0, %v475
        %v477 = vpop.f32.mrb[0].mxu0
        %478 = vmatprep.mubr.bf16.mxu0 0
        %479 = vmatmul.mubr.bf16.gmra.mrb[0].mxu0 %v361
        %v480 = vpop.f32.mrb[0].mxu0
        %v481 = vadd.f32 0.0, %v480
        %v482 = vpop.f32.mrb[0].mxu0
        %v483 = vpop.f32.mrb[0].mxu0
        %v484 = vadd.f32 0.0, %v483
        %v485 = vpop.f32.mrb[0].mxu0
        %486 = vmatprep.mubr.bf16.mxu0 0
        %487 = vmatmul.mubr.bf16.gmra.mrb[0].mxu0 %v362
        %v488 = vpop.f32.mrb[0].mxu0
        %v489 = vadd.f32 0.0, %v488
        %v490 = vpop.f32.mrb[0].mxu0
        %v491 = vpop.f32.mrb[0].mxu0
        %v492 = vadd.f32 0.0, %v491
        %v493 = vpop.f32.mrb[0].mxu0
        %494 = vmatprep.mubr.bf16.mxu0 0
        %495 = vmatmul.mubr.bf16.gmra.mrb[0].mxu0 %v363
        %v496 = vpop.f32.mrb[0].mxu0
        %v497 = vadd.f32 0.0, %v496
        %v498 = vpop.f32.mrb[0].mxu0
        %v499 = vpop.f32.mrb[0].mxu0
        %v500 = vadd.f32 0.0, %v499
        %v501 = vpop.f32.mrb[0].mxu0
        %502 = vmatprep.mubr.bf16.mxu0 0
        %503 = vmatmul.mubr.bf16.gmra.mrb[0].mxu0 %v364
        %v504 = vpop.f32.mrb[0].mxu0
        %v505 = vadd.f32 0.0, %v504
        %v506 = vpop.f32.mrb[0].mxu0
        %v507 = vpop.f32.mrb[0].mxu0
        %v508 = vadd.f32 0.0, %v507
        %v509 = vpop.f32.mrb[0].mxu0
        %510 = vmatprep.mubr.bf16.mxu0 0
        %511 = vmatmul.mubr.bf16.gmra.mrb[0].mxu0 %v365
        %v512 = vpop.f32.mrb[0].mxu0
        %v513 = vadd.f32 0.0, %v512
        %v514 = vpop.f32.mrb[0].mxu0
        %v515 = vpop.f32.mrb[0].mxu0
        %v516 = vadd.f32 0.0, %v515
        %v517 = vpop.f32.mrb[0].mxu0
        %518 = vdwg.mxu0
        %v519 = vadd.f32 %v278, %v457
        %v520 = vadd.f32 %v279, %v460
        %v521 = vadd.f32 %v280, %v465
        %v522 = vadd.f32 %v281, %v468
        %v523 = vadd.f32 %v282, %v473
        %v524 = vadd.f32 %v283, %v476
        %v525 = vadd.f32 %v284, %v481
        %v526 = vadd.f32 %v285, %v484
        %v527 = vadd.f32 %v286, %v489
        %v528 = vadd.f32 %v287, %v492
        %v529 = vadd.f32 %v288, %v497
        %v530 = vadd.f32 %v289, %v500
        %v531 = vadd.f32 %v290, %v505
        %v532 = vadd.f32 %v291, %v508
        %v533 = vadd.f32 %v292, %v513
        %v534 = vadd.f32 %v293, %v516
        %535 = vst [vmem:[#allocation2] sm:$0xff] %v519
        %536 = vst [vmem:[#allocation2 + $0x8] sm:$0xff] %v520
        %537 = vst [vmem:[#allocation2 + $0x10] sm:$0xff] %v521
        %538 = vst [vmem:[#allocation2 + $0x18] sm:$0xff] %v522
        %539 = vst [vmem:[#allocation2 + $0x20] sm:$0xff] %v523
        %540 = vst [vmem:[#allocation2 + $0x28] sm:$0xff] %v524
        %541 = vst [vmem:[#allocation2 + $0x30] sm:$0xff] %v525
        %542 = vst [vmem:[#allocation2 + $0x38] sm:$0xff] %v526
        %543 = vst [vmem:[#allocation2 + $0x40] sm:$0xff] %v527
        %544 = vst [vmem:[#allocation2 + $0x48] sm:$0xff] %v528
        %545 = vst [vmem:[#allocation2 + $0x50] sm:$0xff] %v529
        %546 = vst [vmem:[#allocation2 + $0x58] sm:$0xff] %v530
        %547 = vst [vmem:[#allocation2 + $0x60] sm:$0xff] %v531
        %548 = vst [vmem:[#allocation2 + $0x68] sm:$0xff] %v532
        %549 = vst [vmem:[#allocation2 + $0x70] sm:$0xff] %v533
        %550 = vst [vmem:[#allocation2 + $0x78] sm:$0xff] %v534
        // Predicated region
        $region49: #{tpu_custom_call.1} parent=35 // pred_check
          %p551 = pneg %p258
        $region50: #{tpu_custom_call.1} parent=35 // pred_check_branch
          %553 = sbr.rel (%p551) target = $region52
        $region51: #{tpu_custom_call.1} parent=35 // pred_region
          %v554 = vld [vmem:[#allocation2] sm:$0xff]
          %v555 = vld [vmem:[#allocation2 + $0x8] sm:$0xff]
          %v556 = vld [vmem:[#allocation2 + $0x10] sm:$0xff]
          %v557 = vld [vmem:[#allocation2 + $0x18] sm:$0xff]
          %v558 = vld [vmem:[#allocation2 + $0x20] sm:$0xff]
          %v559 = vld [vmem:[#allocation2 + $0x28] sm:$0xff]
          %v560 = vld [vmem:[#allocation2 + $0x30] sm:$0xff]
          %v561 = vld [vmem:[#allocation2 + $0x38] sm:$0xff]
          %v562 = vld [vmem:[#allocation2 + $0x40] sm:$0xff]
          %v563 = vld [vmem:[#allocation2 + $0x48] sm:$0xff]
          %v564 = vld [vmem:[#allocation2 + $0x50] sm:$0xff]
          %v565 = vld [vmem:[#allocation2 + $0x58] sm:$0xff]
          %v566 = vld [vmem:[#allocation2 + $0x60] sm:$0xff]
          %v567 = vld [vmem:[#allocation2 + $0x68] sm:$0xff]
          %v568 = vld [vmem:[#allocation2 + $0x70] sm:$0xff]
          %v569 = vld [vmem:[#allocation2 + $0x78] sm:$0xff]
          %v570 = vld [vmem:[%s2] sm:$0x1]
          %v572 = vlaneseq
          %v573 = vshrl.u32 %v572, 7
          %v574 = vsub.s32 0, %v573
          %v575 = vrot.slane %v570, %v574
          %v577 = vmul.f32 %v554, %v575
          %v578 = vmul.f32 %v555, %v575
          %v579 = vmul.f32 %v556, %v575
          %v580 = vmul.f32 %v557, %v575
          %v581 = vmul.f32 %v558, %v575
          %v582 = vmul.f32 %v559, %v575
          %v583 = vmul.f32 %v560, %v575
          %v584 = vmul.f32 %v561, %v575
          %v585 = vmul.f32 %v562, %v575
          %v586 = vmul.f32 %v563, %v575
          %v587 = vmul.f32 %v564, %v575
          %v588 = vmul.f32 %v565, %v575
          %v589 = vmul.f32 %v566, %v575
          %v590 = vmul.f32 %v567, %v575
          %v591 = vmul.f32 %v568, %v575
          %v592 = vmul.f32 %v569, %v575
          %v593 = vld [vmem:[%s3] sm:$0x1]
          %v595 = vlaneseq
          %v596 = vshrl.u32 %v595, 7
          %v597 = vsub.s32 0, %v596
          %v598 = vrot.slane %v593, %v597
          %v600 = vadd.f32 %v577, %v598
          %v601 = vadd.f32 %v578, %v598
          %v602 = vadd.f32 %v579, %v598
          %v603 = vadd.f32 %v580, %v598
          %v604 = vadd.f32 %v581, %v598
          %v605 = vadd.f32 %v582, %v598
          %v606 = vadd.f32 %v583, %v598
          %v607 = vadd.f32 %v584, %v598
          %v608 = vadd.f32 %v585, %v598
          %v609 = vadd.f32 %v586, %v598
          %v610 = vadd.f32 %v587, %v598
          %v611 = vadd.f32 %v588, %v598
          %v612 = vadd.f32 %v589, %v598
          %v613 = vadd.f32 %v590, %v598
          %v614 = vadd.f32 %v591, %v598
          %v615 = vadd.f32 %v592, %v598
          %v616 = vpack.c.bf16 %v601, %v600
          %v617 = vpack.c.bf16 %v603, %v602
          %v618 = vpack.c.bf16 %v605, %v604
          %v619 = vpack.c.bf16 %v607, %v606
          %v620 = vpack.c.bf16 %v609, %v608
          %v621 = vpack.c.bf16 %v611, %v610
          %v622 = vpack.c.bf16 %v613, %v612
          %v623 = vpack.c.bf16 %v615, %v614
          %v632 = vunpack.c.l.b16 %v616
          %v633 = vunpack.c.h.b16 %v616
          %v634 = vunpack.c.l.b16 %v617
          %v635 = vunpack.c.h.b16 %v617
          %v636 = vunpack.c.l.b16 %v618
          %v637 = vunpack.c.h.b16 %v618
          %v638 = vunpack.c.l.b16 %v619
          %v639 = vunpack.c.h.b16 %v619
          %v640 = vunpack.c.l.b16 %v620
          %v641 = vunpack.c.h.b16 %v620
          %v642 = vunpack.c.l.b16 %v621
          %v643 = vunpack.c.h.b16 %v621
          %v644 = vunpack.c.l.b16 %v622
          %v645 = vunpack.c.h.b16 %v622
          %v646 = vunpack.c.l.b16 %v623
          %v647 = vunpack.c.h.b16 %v623
          %v648 = vpack.c.b16 %v632, %v632
          %v649 = vpack.c.b16 %v633, %v633
          %v650 = vpack.c.b16 %v634, %v634
          %v651 = vpack.c.b16 %v635, %v635
          %v652 = vpack.c.b16 %v636, %v636
          %v653 = vpack.c.b16 %v637, %v637
          %v654 = vpack.c.b16 %v638, %v638
          %v655 = vpack.c.b16 %v639, %v639
          %v656 = vpack.c.b16 %v640, %v640
          %v657 = vpack.c.b16 %v641, %v641
          %v658 = vpack.c.b16 %v642, %v642
          %v659 = vpack.c.b16 %v643, %v643
          %v660 = vpack.c.b16 %v644, %v644
          %v661 = vpack.c.b16 %v645, %v645
          %v662 = vpack.c.b16 %v646, %v646
          %v663 = vpack.c.b16 %v647, %v647
          %680 = vst [vmem:[%s253] sm:$0xf] %v648
          %681 = vst [vmem:[%s253 + $0x4] sm:$0xf] %v649
          %682 = vst [vmem:[%s253 + $0x8] sm:$0xf] %v650
          %683 = vst [vmem:[%s253 + $0xc] sm:$0xf] %v651
          %684 = vst [vmem:[%s253 + $0x10] sm:$0xf] %v652
          %685 = vst [vmem:[%s253 + $0x14] sm:$0xf] %v653
          %686 = vst [vmem:[%s253 + $0x18] sm:$0xf] %v654
          %687 = vst [vmem:[%s253 + $0x1c] sm:$0xf] %v655
          %688 = vst [vmem:[%s253 + $0x20] sm:$0xf] %v656
          %689 = vst [vmem:[%s253 + $0x24] sm:$0xf] %v657
          %690 = vst [vmem:[%s253 + $0x28] sm:$0xf] %v658
          %691 = vst [vmem:[%s253 + $0x2c] sm:$0xf] %v659
          %692 = vst [vmem:[%s253 + $0x30] sm:$0xf] %v660
          %693 = vst [vmem:[%s253 + $0x34] sm:$0xf] %v661
          %694 = vst [vmem:[%s253 + $0x38] sm:$0xf] %v662
          %695 = vst [vmem:[%s253 + $0x3c] sm:$0xf] %v663
        $region52: #{tpu_custom_call.1} parent=35 // pred_fallthru
          _
        %s696 = sand.u32 %s138, 1
        %s697 = scalar_lea.sflag [#allocation5], %s696
        %s698 = sand.u32 %s138, 1
        %s699 = smul.addr %s698, 64
        %s700 = scalar_lea.vmem [#allocation8], %s699
        // Predicated region
        $region53: #{tpu_custom_call.1} parent=35 // pred_check
          %p701 = pneg %p148
        $region54: #{tpu_custom_call.1} parent=35 // pred_check_branch
          %703 = sbr.rel (%p701) target = $region56
        $region55: #{tpu_custom_call.1} parent=35 // pred_region
          %s704 = smul.u32 16, %s26
          %s706 = ssub.s32 1024, 1024
          %707 = vsyncadd %s697, %s706
          %s708 = smul.addr %s704, 64
          %s709 = scalar_lea.hbm %s4, %s708
          %s710 = sshll.u32 %s700, 4
          %s711 = int_to_ptr.vmem [resolvable:$true] %s710
          %716 = dma.vmem_to_hbm [thread:$0]  %s711, 1024, %s709, %s697, 64, 64, 4
        $region56: #{tpu_custom_call.1} parent=35 // pred_fallthru
          _
      $region36: #{tpu_custom_call.1} parent=5 // pred_fallthru
        _
      %p717 = scmp.le.s32.totalorder 2, %s17
      // Predicated region
      $region57: #{tpu_custom_call.1} parent=5 // pred_check
        %p718 = pneg %p717
      $region58: #{tpu_custom_call.1} parent=5 // pred_check_branch
        %720 = sbr.rel (%p718) target = $region60
      $region59: #{tpu_custom_call.1} parent=5 // pred_region
        %s721 = ssub.s32 %s17, 2
        // Predicated region
        $region61: #{tpu_custom_call.1} parent=59 // pred_check
          %p722 = pneg %p154
        $region62: #{tpu_custom_call.1} parent=59 // pred_check_branch
          %724 = sbr.rel (%p722) target = $region64
        $region63: #{tpu_custom_call.1} parent=59 // pred_region
          %s725 = sand.u32 %s139, 1
          %s726 = scalar_lea.sflag [#allocation5], %s725
          %s727 = sand.u32 %s139, 1
          %s728 = smul.addr %s727, 64
          %s729 = scalar_lea.vmem [#allocation8], %s728
          %730 = dma.done %s726, 1024
        $region64: #{tpu_custom_call.1} parent=59 // pred_fallthru
          _
      $region60: #{tpu_custom_call.1} parent=5 // pred_fallthru
        _
    $region6: #{tpu_custom_call.1} parent=1 // loop_footer
      %s21 = sadd.s32 1, %s17
    $region7: #{tpu_custom_call.1} parent=1 // loop_footer_branch
      %16 = sbr.rel target = $region3
    $region8: #{tpu_custom_call.1} parent=1 // loop_exit
      _
    %731 = vsyncpa [#allocation4], 1
    %s732 = scalar_lea.sflag [#allocation4], 1
    %733 = vsyncpa %s732, 1
    %734 = vsyncpa [#allocation7], 1
    %735 = vsyncpa [#allocation5], 1
    %s736 = scalar_lea.sflag [#allocation5], 1
    %737 = vsyncpa %s736, 1

</llo_original>
